<compile_context>
chip_gen: v7x
topology: tpu7x:2x2x1
jax: 0.10.0
libtpu: 0.0.40
codegen_flags: <defaults>
</compile_context>

<pallas_src>
import jax
import jax.numpy as jnp
from jax.experimental import pallas as pl
from jax.experimental.pallas import tpu as pltpu

_LANE = 128
_SUBLANE = 8


def _leaky_relu(v, slope=0.1):
    return jnp.where(v >= 0, v, slope * v)


def _round_up(x, m):
    return ((x + m - 1) // m) * m


def discriminator_kernel(x_ref, w_ref, w4_ref, b_ref, o_ref):
    """One batch tile: 3x (linear + leaky_relu(0.1)) + final 1-wide linear.

    x_ref : (tile_m, n_in)       input activations (any float dtype)
    w_ref : (3, n_in, n_in)      bf16, layers 1..3 (stored (in, out))
    w4_ref: (8, n_in)            bf16, row 0 = w4^T, rows 1..7 zero (sublane pad)
    b_ref : (4, n_in)            f32, rows 0..2 = b1..b3, b_ref[3, 0] = b4
    o_ref : (1, tile_m)          f32, lane-dense per-row scalar output
    """
    h = x_ref[...].astype(jnp.bfloat16)
    for layer in range(3):
        z = jnp.dot(h, w_ref[layer], preferred_element_type=jnp.float32)
        z = z + b_ref[layer:layer + 1, :]
        h = _leaky_relu(z).astype(jnp.bfloat16)
    # Final layer: contract feature dim so the per-row scalar lands on the lane
    # axis -> unmasked, lane-dense (1, tile_m) store (4 B/row writeback).
    out8 = jnp.dot(w4_ref[...], h.T, preferred_element_type=jnp.float32)  # (8, tile_m)
    out = out8[0:1, :] + b_ref[3:4, 0:1]
    o_ref[...] = out.astype(o_ref.dtype)


def discriminator_forward(x, params, *, tile_m=None):
    """x: (batch, n_in) float32 or bfloat16.
    params: w1..w3 (n_in, n_in), w4 (n_in, 1), b1..b3 (1, n_in), b4 (1, 1) — f32.
    Returns (batch, 1) float32."""
    batch, n_in = x.shape

    # ---- pack operands (bf16 weights, one bias array, w4 as a row block) ----
    w_stack = jnp.stack(
        [params["w1"], params["w2"], params["w3"]], axis=0).astype(jnp.bfloat16)
    w4_rows = jnp.zeros((_SUBLANE, n_in), jnp.bfloat16).at[0, :].set(
        params["w4"].astype(jnp.bfloat16).reshape(-1))
    b_pack = jnp.zeros((4, n_in), jnp.float32)
    b_pack = b_pack.at[0, :].set(params["b1"].reshape(-1).astype(jnp.float32))
    b_pack = b_pack.at[1, :].set(params["b2"].reshape(-1).astype(jnp.float32))
    b_pack = b_pack.at[2, :].set(params["b3"].reshape(-1).astype(jnp.float32))
    b_pack = b_pack.at[3, 0].set(params["b4"].reshape(-1)[0].astype(jnp.float32))

    # ---- batch tiling: large tiles, minimal padding, >=2 tiles for v7x ----
    if tile_m is None:
        cap = 2048
        num_tiles = max(pl.cdiv(batch, cap), 1)
        if num_tiles == 1 and batch >= 4 * _LANE:
            num_tiles = 2                     # keep both v7x TensorCores busy
        tile_m = _round_up(pl.cdiv(batch, num_tiles), _LANE)
    else:
        tile_m = _round_up(tile_m, _LANE)     # lane-dense output needs 128-mult

    batch_pad = _round_up(batch, tile_m)
    if batch_pad != batch:
        x = jnp.pad(x, ((0, batch_pad - batch), (0, 0)))
    grid = (batch_pad // tile_m,)

    def resident(shape):
        # constant block index -> operand stays resident in VMEM across steps
        return pl.BlockSpec(shape, lambda i: (0,) * len(shape))

    flops = 2 * batch_pad * n_in * (3 * n_in + 1)
    bytes_accessed = (x.size * x.dtype.itemsize
                      + (w_stack.size + w4_rows.size) * 2
                      + b_pack.size * 4
                      + batch_pad * 4)

    out = pl.pallas_call(
        discriminator_kernel,
        out_shape=jax.ShapeDtypeStruct((1, batch_pad), jnp.float32),
        grid_spec=pltpu.PrefetchScalarGridSpec(
            num_scalar_prefetch=0,
            grid=grid,
            in_specs=[
                pl.BlockSpec((tile_m, n_in), lambda i: (i, 0)),  # x: batch-tiled
                resident(w_stack.shape),                         # (3, n_in, n_in)
                resident(w4_rows.shape),                         # (8, n_in)
                resident(b_pack.shape),                          # (4, n_in)
            ],
            out_specs=pl.BlockSpec((1, tile_m), lambda i: (0, i)),
        ),
        compiler_params=pltpu.CompilerParams(
            dimension_semantics=("parallel",)),      # batch tiles shard across TCs (v7x)
        cost_estimate=pl.CostEstimate(
            flops=flops, transcendentals=0, bytes_accessed=bytes_accessed),
    )(x, w_stack, w4_rows, b_pack)

    return out[0, :batch].reshape(batch, 1)


def init_params(key, n_in):
    """Deterministic init mimicking PyTorch nn.Linear default (uniform +/- 1/sqrt(fan_in)).
    Weights stored (in_features, out_features) so y = x @ W + b."""
    dims = [(n_in, n_in), (n_in, n_in), (n_in, n_in), (n_in, 1)]
    params = {}
    keys = jax.random.split(key, 2 * len(dims))
    for i, (fan_in, fan_out) in enumerate(dims):
        bound = 1.0 / jnp.sqrt(fan_in)
        params[f"w{i + 1}"] = jax.random.uniform(
            keys[2 * i], (fan_in, fan_out),
            minval=-bound, maxval=bound, dtype=jnp.float32)
        params[f"b{i + 1}"] = jax.random.uniform(
            keys[2 * i + 1], (1, fan_out),
            minval=-bound, maxval=bound, dtype=jnp.float32)
    return params


def reference_forward_bf16(x, params):
    """Pure-JAX reference mirroring the kernel's bf16-matmul / f32-accumulate path."""
    bf16 = jnp.bfloat16

    def lin(h, w, b):
        return jnp.dot(h.astype(bf16), w.astype(bf16),
                       preferred_element_type=jnp.float32) + b

    h = _leaky_relu(lin(x, params["w1"], params["b1"]))
    h = _leaky_relu(lin(h, params["w2"], params["b2"]))
    h = _leaky_relu(lin(h, params["w3"], params["b3"]))
    return lin(h, params["w4"], params["b4"])


def reference_forward_f32(x, params):
    """Full-f32 forward (PyTorch semantics) for a loose sanity check."""
    hi = jax.lax.Precision.HIGHEST

    def lin(h, w, b):
        return jnp.dot(h, w, precision=hi, preferred_element_type=jnp.float32) + b

    h = _leaky_relu(lin(x, params["w1"], params["b1"]))
    h = _leaky_relu(lin(h, params["w2"], params["b2"]))
    h = _leaky_relu(lin(h, params["w3"], params["b3"]))
    return lin(h, params["w4"], params["b4"])


if __name__ == "__main__":
    # Module hyper-params: dimension=4, config.TRIM_LENGTH=14
    #   n_in = dimension * (TRIM_LENGTH // 2 + 1) * 2 = 4 * 8 * 2 = 64
    # TODO(synk): nn.BCELoss (self.criterion) is a training-time loss, not part of forward.
    dimension = 4
    trim_length = 14
    n_in = dimension * (trim_length // 2 + 1) * 2  # 64

    batch = 256
    key = jax.random.PRNGKey(0)
    k_x, k_p = jax.random.split(key)
    x = jax.random.normal(k_x, (batch, n_in), dtype=jnp.float32)
    params = init_params(k_p, n_in)

    # tile_m=128 -> grid=(2,): exercises the batch-tiled, pipelined, multi-step path.
    out_tiled = jax.block_until_ready(discriminator_forward(x, params, tile_m=128))
    # default heuristic path (grid=(1,) at this small batch).
    out_default = jax.block_until_ready(discriminator_forward(x, params))

    ref_bf16 = reference_forward_bf16(x, params)
    ref_f32 = reference_forward_f32(x, params)

    assert out_tiled.shape == (batch, 1), out_tiled.shape
    assert out_default.shape == (batch, 1), out_default.shape
    assert jnp.allclose(out_tiled, ref_bf16, atol=1e-3, rtol=1e-3), float(
        jnp.max(jnp.abs(out_tiled - ref_bf16)))
    assert jnp.allclose(out_default, ref_bf16, atol=1e-3, rtol=1e-3), float(
        jnp.max(jnp.abs(out_default - ref_bf16)))
    # loose check against true f32 semantics (bf16 MXU inputs -> small deviation)
    assert jnp.allclose(out_tiled, ref_f32, atol=5e-2, rtol=0), float(
        jnp.max(jnp.abs(out_tiled - ref_f32)))

    print("KERNEL_OK")
</pallas_src>

<mosaic_0001>
module attributes {stable_mosaic.version = 11 : i64} {
  func.func @discriminator_kernel(%arg0: i32, %arg1: memref<128x64xf32, #tpu.memory_space<vmem>>, %arg2: memref<3x64x64xbf16, #tpu.memory_space<vmem>>, %arg3: memref<8x64xbf16, #tpu.memory_space<vmem>>, %arg4: memref<4x64xf32, #tpu.memory_space<vmem>>, %arg5: memref<1x128xf32, #tpu.memory_space<vmem>>) attributes {dimension_semantics = [#tpu.dimension_semantics<parallel>], iteration_bounds = array<i64: 2>, scalar_prefetch = 0 : i64, scratch_operands = 0 : i64, tpu.core_type = #tpu.core_type<tc>, window_params = [{transform_indices = @transform_0, window_bounds = array<i64: 128, 64>}, {pipeline_mode = #tpu.pipeline_mode<synchronous>, transform_indices = @transform_1, window_bounds = array<i64: 3, 64, 64>}, {pipeline_mode = #tpu.pipeline_mode<synchronous>, transform_indices = @transform_2, window_bounds = array<i64: 8, 64>}, {pipeline_mode = #tpu.pipeline_mode<synchronous>, transform_indices = @transform_3, window_bounds = array<i64: 4, 64>}, {transform_indices = @transform_4, window_bounds = array<i64: 1, 128>}]} {
    %c0 = arith.constant 0 : index
    %c0_0 = arith.constant 0 : index
    %0 = vector.load %arg1[%c0, %c0_0] : memref<128x64xf32, #tpu.memory_space<vmem>>, vector<128x64xf32>
    %1 = arith.truncf %0 : vector<128x64xf32> to vector<128x64xbf16>
    %c0_1 = arith.constant 0 : index
    %c0_2 = arith.constant 0 : index
    %c0_3 = arith.constant 0 : index
    %2 = vector.load %arg2[%c0_1, %c0_2, %c0_3] : memref<3x64x64xbf16, #tpu.memory_space<vmem>>, vector<1x64x64xbf16>
    %3 = vector.shape_cast %2 : vector<1x64x64xbf16> to vector<64x64xbf16>
    %cst = arith.constant dense<0.000000e+00> : vector<128x64xf32>
    %4 = tpu.matmul %1, %3, %cst {dimension_numbers = #tpu.dot_dimension_numbers<[1], [0], [0], [1], [0, 0, 1, 1], [], []>} : vector<128x64xbf16>, vector<64x64xbf16>, vector<128x64xf32> -> vector<128x64xf32>
    %c0_4 = arith.constant 0 : index
    %c0_5 = arith.constant 0 : index
    %5 = vector.load %arg4[%c0_4, %c0_5] : memref<4x64xf32, #tpu.memory_space<vmem>>, vector<1x64xf32>
    %6 = vector.broadcast %5 : vector<1x64xf32> to vector<128x64xf32>
    %7 = arith.addf %4, %6 : vector<128x64xf32>
    %cst_6 = arith.constant 0.000000e+00 : f32
    %8 = vector.broadcast %cst_6 : f32 to vector<128x64xf32>
    %9 = arith.cmpf oge, %7, %8 : vector<128x64xf32>
    %cst_7 = arith.constant 1.000000e-01 : f32
    %10 = vector.broadcast %cst_7 : f32 to vector<128x64xf32>
    %11 = arith.mulf %10, %7 : vector<128x64xf32>
    %12 = arith.select %9, %7, %11 : vector<128x64xi1>, vector<128x64xf32>
    %13 = arith.truncf %12 : vector<128x64xf32> to vector<128x64xbf16>
    %c1 = arith.constant 1 : index
    %c0_8 = arith.constant 0 : index
    %c0_9 = arith.constant 0 : index
    %14 = vector.load %arg2[%c1, %c0_8, %c0_9] : memref<3x64x64xbf16, #tpu.memory_space<vmem>>, vector<1x64x64xbf16>
    %15 = vector.shape_cast %14 : vector<1x64x64xbf16> to vector<64x64xbf16>
    %cst_10 = arith.constant dense<0.000000e+00> : vector<128x64xf32>
    %16 = tpu.matmul %13, %15, %cst_10 {dimension_numbers = #tpu.dot_dimension_numbers<[1], [0], [0], [1], [0, 0, 1, 1], [], []>} : vector<128x64xbf16>, vector<64x64xbf16>, vector<128x64xf32> -> vector<128x64xf32>
    %c1_11 = arith.constant 1 : index
    %c0_12 = arith.constant 0 : index
    %17 = vector.load %arg4[%c1_11, %c0_12] : memref<4x64xf32, #tpu.memory_space<vmem>>, vector<1x64xf32>
    %18 = vector.broadcast %17 : vector<1x64xf32> to vector<128x64xf32>
    %19 = arith.addf %16, %18 : vector<128x64xf32>
    %cst_13 = arith.constant 0.000000e+00 : f32
    %20 = vector.broadcast %cst_13 : f32 to vector<128x64xf32>
    %21 = arith.cmpf oge, %19, %20 : vector<128x64xf32>
    %cst_14 = arith.constant 1.000000e-01 : f32
    %22 = vector.broadcast %cst_14 : f32 to vector<128x64xf32>
    %23 = arith.mulf %22, %19 : vector<128x64xf32>
    %24 = arith.select %21, %19, %23 : vector<128x64xi1>, vector<128x64xf32>
    %25 = arith.truncf %24 : vector<128x64xf32> to vector<128x64xbf16>
    %c2 = arith.constant 2 : index
    %c0_15 = arith.constant 0 : index
    %c0_16 = arith.constant 0 : index
    %26 = vector.load %arg2[%c2, %c0_15, %c0_16] : memref<3x64x64xbf16, #tpu.memory_space<vmem>>, vector<1x64x64xbf16>
    %27 = vector.shape_cast %26 : vector<1x64x64xbf16> to vector<64x64xbf16>
    %cst_17 = arith.constant dense<0.000000e+00> : vector<128x64xf32>
    %28 = tpu.matmul %25, %27, %cst_17 {dimension_numbers = #tpu.dot_dimension_numbers<[1], [0], [0], [1], [0, 0, 1, 1], [], []>} : vector<128x64xbf16>, vector<64x64xbf16>, vector<128x64xf32> -> vector<128x64xf32>
    %c2_18 = arith.constant 2 : index
    %c0_19 = arith.constant 0 : index
    %29 = vector.load %arg4[%c2_18, %c0_19] : memref<4x64xf32, #tpu.memory_space<vmem>>, vector<1x64xf32>
    %30 = vector.broadcast %29 : vector<1x64xf32> to vector<128x64xf32>
    %31 = arith.addf %28, %30 : vector<128x64xf32>
    %cst_20 = arith.constant 0.000000e+00 : f32
    %32 = vector.broadcast %cst_20 : f32 to vector<128x64xf32>
    %33 = arith.cmpf oge, %31, %32 : vector<128x64xf32>
    %cst_21 = arith.constant 1.000000e-01 : f32
    %34 = vector.broadcast %cst_21 : f32 to vector<128x64xf32>
    %35 = arith.mulf %34, %31 : vector<128x64xf32>
    %36 = arith.select %33, %31, %35 : vector<128x64xi1>, vector<128x64xf32>
    %37 = arith.truncf %36 : vector<128x64xf32> to vector<128x64xbf16>
    %c0_22 = arith.constant 0 : index
    %c0_23 = arith.constant 0 : index
    %38 = vector.load %arg3[%c0_22, %c0_23] : memref<8x64xbf16, #tpu.memory_space<vmem>>, vector<8x64xbf16>
    %39 = tpu.transpose %37, [1, 0] : vector<128x64xbf16> -> vector<64x128xbf16>
    %cst_24 = arith.constant dense<0.000000e+00> : vector<8x128xf32>
    %40 = tpu.matmul %38, %39, %cst_24 {dimension_numbers = #tpu.dot_dimension_numbers<[1], [0], [0], [1], [0, 0, 1, 1], [], []>} : vector<8x64xbf16>, vector<64x128xbf16>, vector<8x128xf32> -> vector<8x128xf32>
    %41 = vector.extract_strided_slice %40 {offsets = [0, 0], sizes = [1, 128], strides = [1, 1]} : vector<8x128xf32> to vector<1x128xf32>
    %c3 = arith.constant 3 : index
    %c0_25 = arith.constant 0 : index
    %42 = vector.load %arg4[%c3, %c0_25] : memref<4x64xf32, #tpu.memory_space<vmem>>, vector<1x1xf32>
    %43 = vector.broadcast %42 : vector<1x1xf32> to vector<1x128xf32>
    %44 = arith.addf %41, %43 : vector<1x128xf32>
    %c0_26 = arith.constant 0 : index
    %c0_27 = arith.constant 0 : index
    %45 = vector.load %arg5[%c0_26, %c0_27] : memref<1x128xf32, #tpu.memory_space<vmem>>, vector<1x128xf32>
    tpu.vector_store %arg5[%c0_26, %c0_27], %44 {strides = array<i32>} : memref<1x128xf32, #tpu.memory_space<vmem>>, vector<1x128xf32>,
    return
  }
  func.func @transform_0(%arg0: i32) -> (i32, i32) {
    %c0_i32 = arith.constant 0 : i32
    %c0_i32_0 = arith.constant 0 : i32
    return %arg0, %c0_i32 : i32, i32
  }
  func.func @transform_1(%arg0: i32) -> (i32, i32, i32) {
    %c0_i32 = arith.constant 0 : i32
    %c0_i32_0 = arith.constant 0 : i32
    %c0_i32_1 = arith.constant 0 : i32
    %c0_i32_2 = arith.constant 0 : i32
    return %c0_i32, %c0_i32_0, %c0_i32_1 : i32, i32, i32
  }
  func.func @transform_2(%arg0: i32) -> (i32, i32) {
    %c0_i32 = arith.constant 0 : i32
    %c0_i32_0 = arith.constant 0 : i32
    %c0_i32_1 = arith.constant 0 : i32
    return %c0_i32, %c0_i32_0 : i32, i32
  }
  func.func @transform_3(%arg0: i32) -> (i32, i32) {
    %c0_i32 = arith.constant 0 : i32
    %c0_i32_0 = arith.constant 0 : i32
    %c0_i32_1 = arith.constant 0 : i32
    return %c0_i32, %c0_i32_0 : i32, i32
  }
  func.func @transform_4(%arg0: i32) -> (i32, i32) {
    %c0_i32 = arith.constant 0 : i32
    %c0_i32_0 = arith.constant 0 : i32
    return %c0_i32, %arg0 : i32, i32
  }
}

</mosaic_0001>

<llo_original>
// kernel: tpu_custom_call.1
$region0: #{tpu_custom_call.1}
  #allocation0 [shape = 'u32[]', space=smem, size = 0x4, offset = 0x4, fixed_abs, tag = 'smem constant byte address 0x4 - core index']
  #allocation1 [shape = 'u32[144,128]{1,0:T(1,128)}', space=vmem, size = 0x12000, scoped, tag = 'internal scratch']
  %s0 = inlined_call_operand.vmem [shape: f32[256,64], index: 0, kind: input, shape index: {}]
  %s1 = inlined_call_operand.vmem [shape: bf16[3,64,64], index: 1, kind: input, shape index: {}]
  %s2 = inlined_call_operand.vmem [shape: bf16[8,64], index: 2, kind: input, shape index: {}]
  %s3 = inlined_call_operand.vmem [shape: f32[4,64], index: 3, kind: input, shape index: {}]
  %s4 = inlined_call_operand.hbm [shape: f32[1,256], index: 4, kind: output, shape index: {}]
  %s5 = sld [smem:[#allocation0]]
  $region49: #{tpu_custom_call.1} parent=0
    _
  %s7 = ssub.s32 1, %s5
  %s8 = scalar_select 0, %s7, %s5
  $region1: #{tpu_custom_call.1} parent=0
    #allocation2 [shape = 'u8[1024]{0}', space=vmem, size = 0x400, scoped, tag = 'output window, operand 0']
    #allocation3 [shape = 's32[2]{0}', space=sflag, size = 0x8, scoped, tag = 'scoped memory for tpu_custom_call.1']
    %9 = vsyncpa [#allocation3], 0
    %s10 = scalar_lea.sflag [#allocation3], 1
    %11 = vsyncpa %s10, 0
    loop: start=0, step=1, limit=4
    $region2: #{tpu_custom_call.1} parent=1 // loop_pre_header
      _
    $region3: #{tpu_custom_call.1} parent=1 // loop_header
      %s13 = sphi 0, %s17
      %p14 = scmp.ge.s32.totalorder %s13, 4
      %s23 = sphi 0, %s25
      %s26 = sphi 0, %s23
      %s27 = sphi 0, %s26
      %s43 = sphi 0, %s27
      %s47 = sphi 0, %s47
      %s49 = sphi 0, %s47
      %s50 = sphi 0, %s49
      %s64 = sphi 0, %s50
      %s68 = sphi 0, %s68
      %s70 = sphi 0, %s68
      %s71 = sphi 0, %s70
      %s85 = sphi 0, %s71
      %s89 = sphi 0, %s89
      %s91 = sphi 0, %s89
      %s92 = sphi 0, %s91
      %s106 = sphi 0, %s92
      %s112 = sphi 0, %s114
      %s115 = sphi 0, %s112
      %s116 = sphi 0, %s115
      %s132 = sphi 0, %s116
    $region4: #{tpu_custom_call.1} parent=1 // loop_header_branch
      %16 = sbr.rel (%p14) target = $region8
    $region5: #{tpu_custom_call.1} parent=1 // loop_body
      %s18 = ssub.s32 %s13, 1
      %s19 = ssub.s32 %s13, 2
      %s20 = sadd.s32 %s13, 1
      %s21 = ssub.s32 %s13, %s20
      %p22 = scmp.eq.s32.totalorder %s21, 0
      %s24 = sadd.s32 %s23, 1
      %s25 = scalar_select %p22, %s23, %s24
      %p28 = pneg %p22
      %p29 = scmp.eq.s32.totalorder %s13, 1
      %p30 = por %p28, %p29
      %p31 = scmp.ne.s32.totalorder %s23, %s26
      %p32 = scmp.eq.s32.totalorder %s13, 0
      %p33 = por %p31, %p32
      %p34 = scmp.ne.s32.totalorder %s23, %s26
      %p35 = scmp.eq.s32.totalorder %s18, 1
      %p36 = por %p34, %p35
      %p37 = scmp.ne.s32.totalorder %s26, %s27
      %p38 = scmp.eq.s32.totalorder %s18, 0
      %p39 = por %p37, %p38
      %p40 = scmp.ne.s32.totalorder %s26, %s27
      %p41 = scmp.eq.s32.totalorder %s19, 1
      %p42 = por %p40, %p41
      %p44 = scmp.ne.s32.totalorder %s27, %s43
      %p45 = scmp.eq.s32.totalorder %s19, 0
      %p46 = por %p44, %p45
      %s48 = sadd.s32 %s47, 1
      %p51 = scmp.eq.s32.totalorder %s13, 1
      %p52 = scmp.ne.s32.totalorder %s47, %s49
      %p53 = scmp.eq.s32.totalorder %s13, 0
      %p54 = por %p52, %p53
      %p55 = scmp.ne.s32.totalorder %s47, %s49
      %p56 = scmp.eq.s32.totalorder %s18, 1
      %p57 = por %p55, %p56
      %p58 = scmp.ne.s32.totalorder %s49, %s50
      %p59 = scmp.eq.s32.totalorder %s18, 0
      %p60 = por %p58, %p59
      %p61 = scmp.ne.s32.totalorder %s49, %s50
      %p62 = scmp.eq.s32.totalorder %s19, 1
      %p63 = por %p61, %p62
      %p65 = scmp.ne.s32.totalorder %s50, %s64
      %p66 = scmp.eq.s32.totalorder %s19, 0
      %p67 = por %p65, %p66
      %s69 = sadd.s32 %s68, 1
      %p72 = scmp.eq.s32.totalorder %s13, 1
      %p73 = scmp.ne.s32.totalorder %s68, %s70
      %p74 = scmp.eq.s32.totalorder %s13, 0
      %p75 = por %p73, %p74
      %p76 = scmp.ne.s32.totalorder %s68, %s70
      %p77 = scmp.eq.s32.totalorder %s18, 1
      %p78 = por %p76, %p77
      %p79 = scmp.ne.s32.totalorder %s70, %s71
      %p80 = scmp.eq.s32.totalorder %s18, 0
      %p81 = por %p79, %p80
      %p82 = scmp.ne.s32.totalorder %s70, %s71
      %p83 = scmp.eq.s32.totalorder %s19, 1
      %p84 = por %p82, %p83
      %p86 = scmp.ne.s32.totalorder %s71, %s85
      %p87 = scmp.eq.s32.totalorder %s19, 0
      %p88 = por %p86, %p87
      %s90 = sadd.s32 %s89, 1
      %p93 = scmp.eq.s32.totalorder %s13, 1
      %p94 = scmp.ne.s32.totalorder %s89, %s91
      %p95 = scmp.eq.s32.totalorder %s13, 0
      %p96 = por %p94, %p95
      %p97 = scmp.ne.s32.totalorder %s89, %s91
      %p98 = scmp.eq.s32.totalorder %s18, 1
      %p99 = por %p97, %p98
      %p100 = scmp.ne.s32.totalorder %s91, %s92
      %p101 = scmp.eq.s32.totalorder %s18, 0
      %p102 = por %p100, %p101
      %p103 = scmp.ne.s32.totalorder %s91, %s92
      %p104 = scmp.eq.s32.totalorder %s19, 1
      %p105 = por %p103, %p104
      %p107 = scmp.ne.s32.totalorder %s92, %s106
      %p108 = scmp.eq.s32.totalorder %s19, 0
      %p109 = por %p107, %p108
      %s110 = ssub.s32 %s13, %s20
      %p111 = scmp.eq.s32.totalorder %s110, 0
      %s113 = sadd.s32 %s112, 1
      %s114 = scalar_select %p111, %s112, %s113
      %p117 = pneg %p111
      %p118 = scmp.eq.s32.totalorder %s13, 1
      %p119 = por %p117, %p118
      %p120 = scmp.ne.s32.totalorder %s112, %s115
      %p121 = scmp.eq.s32.totalorder %s13, 0
      %p122 = por %p120, %p121
      %p123 = scmp.ne.s32.totalorder %s112, %s115
      %p124 = scmp.eq.s32.totalorder %s18, 1
      %p125 = por %p123, %p124
      %p126 = scmp.ne.s32.totalorder %s115, %s116
      %p127 = scmp.eq.s32.totalorder %s18, 0
      %p128 = por %p126, %p127
      %p129 = scmp.ne.s32.totalorder %s115, %s116
      %p130 = scmp.eq.s32.totalorder %s19, 1
      %p131 = por %p129, %p130
      %p133 = scmp.ne.s32.totalorder %s116, %s132
      %p134 = scmp.eq.s32.totalorder %s19, 0
      %p135 = por %p133, %p134
      %p136 = scmp.le.s32.totalorder 1, %s13
      %p137 = scmp.lt.s32.totalorder %s13, 3
      %p138 = pnand %p136, %p137
      %p139 = pneg %p138
      // Predicated region
      $region9: #{tpu_custom_call.1} parent=5 // pred_check
        _
      $region10: #{tpu_custom_call.1} parent=5 // pred_check_branch
        %141 = sbr.rel (%p138) target = $region12
      $region11: #{tpu_custom_call.1} parent=5 // pred_region
        %s142 = ssub.s32 %s13, 1
        // Predicated region
        $region13: #{tpu_custom_call.1} parent=11 // pred_check
          %p143 = pneg %p60
        $region14: #{tpu_custom_call.1} parent=11 // pred_check_branch
          %145 = sbr.rel (%p143) target = $region16
        $region15: #{tpu_custom_call.1} parent=11 // pred_region
          _
        $region16: #{tpu_custom_call.1} parent=11 // pred_fallthru
          _
        // Predicated region
        $region17: #{tpu_custom_call.1} parent=11 // pred_check
          %p146 = pneg %p81
        $region18: #{tpu_custom_call.1} parent=11 // pred_check_branch
          %148 = sbr.rel (%p146) target = $region20
        $region19: #{tpu_custom_call.1} parent=11 // pred_region
          _
        $region20: #{tpu_custom_call.1} parent=11 // pred_fallthru
          _
        // Predicated region
        $region21: #{tpu_custom_call.1} parent=11 // pred_check
          %p149 = pneg %p102
        $region22: #{tpu_custom_call.1} parent=11 // pred_check_branch
          %151 = sbr.rel (%p149) target = $region24
        $region23: #{tpu_custom_call.1} parent=11 // pred_region
          _
        $region24: #{tpu_custom_call.1} parent=11 // pred_fallthru
          _
      $region12: #{tpu_custom_call.1} parent=5 // pred_fallthru
        _
      %p152 = scmp.lt.s32.totalorder %s13, 2
      // Predicated region
      $region25: #{tpu_custom_call.1} parent=5 // pred_check
        %p153 = pneg %p152
      $region26: #{tpu_custom_call.1} parent=5 // pred_check_branch
        %155 = sbr.rel (%p153) target = $region28
      $region27: #{tpu_custom_call.1} parent=5 // pred_region
        // Predicated region
        $region29: #{tpu_custom_call.1} parent=27 // pred_check
          %p156 = pneg %p33
        $region30: #{tpu_custom_call.1} parent=27 // pred_check_branch
          %158 = sbr.rel (%p156) target = $region32
        $region31: #{tpu_custom_call.1} parent=27 // pred_region
          %s159 = smul.u32 16, %s13
          %p160 = scmp.lt.s32.totalorder %s159, 31
          %s161 = scalar_select %p160, %s159, 31
          %s162 = smul.addr %s161, 8
          %s163 = scalar_lea.vmem %s0, %s162
          %s164 = smul.u32 16, %s13
        $region32: #{tpu_custom_call.1} parent=27 // pred_fallthru
          _
      $region28: #{tpu_custom_call.1} parent=5 // pred_fallthru
        _
      %p165 = scmp.le.s32.totalorder 1, %s13
      %p166 = scmp.lt.s32.totalorder %s13, 3
      %p167 = pnand %p165, %p166
      %p168 = pneg %p167
      // Predicated region
      $region33: #{tpu_custom_call.1} parent=5 // pred_check
        _
      $region34: #{tpu_custom_call.1} parent=5 // pred_check_branch
        %170 = sbr.rel (%p167) target = $region36
      $region35: #{tpu_custom_call.1} parent=5 // pred_region
        %s171 = ssub.s32 %s13, 1
        %s172 = smul.u32 16, %s18
        %p173 = scmp.lt.s32.totalorder %s172, 31
        %s174 = scalar_select %p173, %s172, 31
        %s175 = smul.addr %s174, 8
        %s176 = scalar_lea.vmem %s0, %s175
        %p177 = pneg %p39
        %p178 = pneg %p36
        %p179 = pneg %p60
        %p180 = pneg %p57
        %p181 = pneg %p81
        %p182 = pneg %p78
        %p183 = pneg %p102
        %p184 = pneg %p99
        %p185 = pneg %p128
        %p186 = pneg %p125
        %s187 = sand.u32 %s115, 1
        %s188 = scalar_lea.sflag [#allocation3], %s187
        %s189 = sand.u32 %s115, 1
        %s190 = scalar_lea.vmem [#allocation2], %s189
        %s191 = smul.u32 16, %s18
        %p192 = scmp.lt.s32.totalorder %s191, 31
        %s193 = scalar_select %p192, %s191, 31
        %s194 = smul.addr %s193, 8
        %s195 = scalar_lea.vmem %s0, %s194
        %s196 = smul.u32 16, %s18
        %v198 = vld [vmem:[%s195] sm:$0xff]
        %v199 = vld [vmem:[%s195 + $0x8] sm:$0xff]
        %v200 = vld [vmem:[%s195 + $0x10] sm:$0xff]
        %v201 = vld [vmem:[%s195 + $0x18] sm:$0xff]
        %v202 = vld [vmem:[%s195 + $0x20] sm:$0xff]
        %v203 = vld [vmem:[%s195 + $0x28] sm:$0xff]
        %v204 = vld [vmem:[%s195 + $0x30] sm:$0xff]
        %v205 = vld [vmem:[%s195 + $0x38] sm:$0xff]
        %v206 = vld [vmem:[%s195 + $0x40] sm:$0xff]
        %v207 = vld [vmem:[%s195 + $0x48] sm:$0xff]
        %v208 = vld [vmem:[%s195 + $0x50] sm:$0xff]
        %v209 = vld [vmem:[%s195 + $0x58] sm:$0xff]
        %v210 = vld [vmem:[%s195 + $0x60] sm:$0xff]
        %v211 = vld [vmem:[%s195 + $0x68] sm:$0xff]
        %v212 = vld [vmem:[%s195 + $0x70] sm:$0xff]
        %v213 = vld [vmem:[%s195 + $0x78] sm:$0xff]
        %v214 = vpack.c.bf16 %v199, %v198
        %v215 = vpack.c.bf16 %v201, %v200
        %v216 = vpack.c.bf16 %v203, %v202
        %v217 = vpack.c.bf16 %v205, %v204
        %v218 = vpack.c.bf16 %v207, %v206
        %v219 = vpack.c.bf16 %v209, %v208
        %v220 = vpack.c.bf16 %v211, %v210
        %v221 = vpack.c.bf16 %v213, %v212
        %v222 = vld [vmem:[%s1] sm:$0xf]
        %v223 = vld [vmem:[%s1 + $0x4] sm:$0xf]
        %v224 = vld [vmem:[%s1 + $0x8] sm:$0xf]
        %v225 = vld [vmem:[%s1 + $0xc] sm:$0xf]
        %v226 = vld [vmem:[%s1 + $0x10] sm:$0xf]
        %v227 = vld [vmem:[%s1 + $0x14] sm:$0xf]
        %v228 = vld [vmem:[%s1 + $0x18] sm:$0xf]
        %v229 = vld [vmem:[%s1 + $0x1c] sm:$0xf]
        %v230 = vld [vmem:[%s3] sm:$0x1]
        %v231 = vlaneseq
        %v232 = vshrl.u32 %v231, 7
        %v233 = vsub.s32 0, %v232
        %v234 = vrot.slane %v230, %v233
        %v243 = vunpack.c.l.b16 %v222
        %v244 = vunpack.c.l.b16 %v223
        %v245 = vunpack.c.l.b16 %v224
        %v246 = vunpack.c.l.b16 %v225
        %v247 = vunpack.c.l.b16 %v226
        %v248 = vunpack.c.l.b16 %v227
        %v249 = vunpack.c.l.b16 %v228
        %v250 = vunpack.c.l.b16 %v229
        %v251 = vpack.c.b16 %v244, %v243
        %v252 = vpack.c.b16 %v246, %v245
        %v253 = vpack.c.b16 %v248, %v247
        %v254 = vpack.c.b16 %v250, %v249
        %vm259 = vcmask 523264
        %v261 = vsel %vm259, %v214, 0
        %v264 = vsel %vm259, %v215, 0
        %v267 = vsel %vm259, %v216, 0
        %v270 = vsel %vm259, %v217, 0
        %v273 = vsel %vm259, %v218, 0
        %v276 = vsel %vm259, %v219, 0
        %v279 = vsel %vm259, %v220, 0
        %v282 = vsel %vm259, %v221, 0
        %284 = vmatprep.subr.bf16.mxu0 0
        %285 = vmatpush1.bf16.msra.mxu0 %v251
        %286 = vmatprep.subr.bf16.mxu0 0
        %287 = vmatpush1.bf16.msra.mxu0 %v252
        %288 = vmatprep.subr.bf16.mxu0 0
        %289 = vmatpush1.bf16.msra.mxu0 %v253
        %290 = vmatprep.subr.bf16.mxu0 0
        %291 = vmatpush1.bf16.msra.mxu0 %v254
        %292 = vmatprep.subr.bf16.mxu0 0
        %293 = vmatpush1.bf16.msra.mxu0 0
        %294 = vmatprep.subr.bf16.mxu0 0
        %295 = vmatpush1.bf16.msra.mxu0 0
        %296 = vmatprep.subr.bf16.mxu0 0
        %297 = vmatpush1.bf16.msra.mxu0 0
        %298 = vmatprep.subr.bf16.mxu0 0
        %299 = vmatpush1.bf16.msra.mxu0 0
        %300 = vmatprep.subr.bf16.mxu0 0
        %301 = vmatpush1.bf16.msra.mxu0 0
        %302 = vmatprep.subr.bf16.mxu0 0
        %303 = vmatpush1.bf16.msra.mxu0 0
        %304 = vmatprep.subr.bf16.mxu0 0
        %305 = vmatpush1.bf16.msra.mxu0 0
        %306 = vmatprep.subr.bf16.mxu0 0
        %307 = vmatpush1.bf16.msra.mxu0 0
        %308 = vmatprep.subr.bf16.mxu0 0
        %309 = vmatpush1.bf16.msra.mxu0 0
        %310 = vmatprep.subr.bf16.mxu0 0
        %311 = vmatpush1.bf16.msra.mxu0 0
        %312 = vmatprep.subr.bf16.mxu0 0
        %313 = vmatpush1.bf16.msra.mxu0 0
        %314 = vmatprep.subr.bf16.mxu0 0
        %315 = vmatpush1.bf16.msra.mxu0 0
        %316 = vmatprep.mubr.bf16.mxu0 0
        %317 = vmatmul.mubr.bf16.gmra.mrb[0].mxu0 %v261
        %v318 = vpop.f32.mrb[0].mxu0
        %v319 = vadd.f32 %v234, %v318
        %v320 = vpop.f32.mrb[0].mxu0
        %v321 = vpop.f32.mrb[0].mxu0
        %v322 = vadd.f32 %v234, %v321
        %v323 = vpop.f32.mrb[0].mxu0
        %324 = vmatprep.mubr.bf16.mxu0 0
        %325 = vmatmul.mubr.bf16.gmra.mrb[0].mxu0 %v264
        %v326 = vpop.f32.mrb[0].mxu0
        %v327 = vadd.f32 %v234, %v326
        %v328 = vpop.f32.mrb[0].mxu0
        %v329 = vpop.f32.mrb[0].mxu0
        %v330 = vadd.f32 %v234, %v329
        %v331 = vpop.f32.mrb[0].mxu0
        %332 = vmatprep.mubr.bf16.mxu0 0
        %333 = vmatmul.mubr.bf16.gmra.mrb[0].mxu0 %v267
        %v334 = vpop.f32.mrb[0].mxu0
        %v335 = vadd.f32 %v234, %v334
        %v336 = vpop.f32.mrb[0].mxu0
        %v337 = vpop.f32.mrb[0].mxu0
        %v338 = vadd.f32 %v234, %v337
        %v339 = vpop.f32.mrb[0].mxu0
        %340 = vmatprep.mubr.bf16.mxu0 0
        %341 = vmatmul.mubr.bf16.gmra.mrb[0].mxu0 %v270
        %v342 = vpop.f32.mrb[0].mxu0
        %v343 = vadd.f32 %v234, %v342
        %v344 = vpop.f32.mrb[0].mxu0
        %v345 = vpop.f32.mrb[0].mxu0
        %v346 = vadd.f32 %v234, %v345
        %v347 = vpop.f32.mrb[0].mxu0
        %348 = vmatprep.mubr.bf16.mxu0 0
        %349 = vmatmul.mubr.bf16.gmra.mrb[0].mxu0 %v273
        %v350 = vpop.f32.mrb[0].mxu0
        %v351 = vadd.f32 %v234, %v350
        %v352 = vpop.f32.mrb[0].mxu0
        %v353 = vpop.f32.mrb[0].mxu0
        %v354 = vadd.f32 %v234, %v353
        %v355 = vpop.f32.mrb[0].mxu0
        %356 = vmatprep.mubr.bf16.mxu0 0
        %357 = vmatmul.mubr.bf16.gmra.mrb[0].mxu0 %v276
        %v358 = vpop.f32.mrb[0].mxu0
        %v359 = vadd.f32 %v234, %v358
        %v360 = vpop.f32.mrb[0].mxu0
        %v361 = vpop.f32.mrb[0].mxu0
        %v362 = vadd.f32 %v234, %v361
        %v363 = vpop.f32.mrb[0].mxu0
        %364 = vmatprep.mubr.bf16.mxu0 0
        %365 = vmatmul.mubr.bf16.gmra.mrb[0].mxu0 %v279
        %v366 = vpop.f32.mrb[0].mxu0
        %v367 = vadd.f32 %v234, %v366
        %v368 = vpop.f32.mrb[0].mxu0
        %v369 = vpop.f32.mrb[0].mxu0
        %v370 = vadd.f32 %v234, %v369
        %v371 = vpop.f32.mrb[0].mxu0
        %372 = vmatprep.mubr.bf16.mxu0 0
        %373 = vmatmul.mubr.bf16.gmra.mrb[0].mxu0 %v282
        %v374 = vpop.f32.mrb[0].mxu0
        %v375 = vadd.f32 %v234, %v374
        %v376 = vpop.f32.mrb[0].mxu0
        %v377 = vpop.f32.mrb[0].mxu0
        %v378 = vadd.f32 %v234, %v377
        %v379 = vpop.f32.mrb[0].mxu0
        %380 = vdwg.mxu0
        %vm381 = vcmp.ge.f32.partialorder %v319, 0.0
        %vm382 = vcmp.ge.f32.partialorder %v322, 0.0
        %vm383 = vcmp.ge.f32.partialorder %v327, 0.0
        %vm384 = vcmp.ge.f32.partialorder %v330, 0.0
        %vm385 = vcmp.ge.f32.partialorder %v335, 0.0
        %vm386 = vcmp.ge.f32.partialorder %v338, 0.0
        %vm387 = vcmp.ge.f32.partialorder %v343, 0.0
        %vm388 = vcmp.ge.f32.partialorder %v346, 0.0
        %vm389 = vcmp.ge.f32.partialorder %v351, 0.0
        %vm390 = vcmp.ge.f32.partialorder %v354, 0.0
        %vm391 = vcmp.ge.f32.partialorder %v359, 0.0
        %vm392 = vcmp.ge.f32.partialorder %v362, 0.0
        %vm393 = vcmp.ge.f32.partialorder %v367, 0.0
        %vm394 = vcmp.ge.f32.partialorder %v370, 0.0
        %vm395 = vcmp.ge.f32.partialorder %v375, 0.0
        %vm396 = vcmp.ge.f32.partialorder %v378, 0.0
        %v397 = vmul.f32 %v319, 0.1
        %v398 = vmul.f32 %v322, 0.1
        %v399 = vmul.f32 %v327, 0.1
        %v400 = vmul.f32 %v330, 0.1
        %v401 = vmul.f32 %v335, 0.1
        %v402 = vmul.f32 %v338, 0.1
        %v403 = vmul.f32 %v343, 0.1
        %v404 = vmul.f32 %v346, 0.1
        %v405 = vmul.f32 %v351, 0.1
        %v406 = vmul.f32 %v354, 0.1
        %v407 = vmul.f32 %v359, 0.1
        %v408 = vmul.f32 %v362, 0.1
        %v409 = vmul.f32 %v367, 0.1
        %v410 = vmul.f32 %v370, 0.1
        %v411 = vmul.f32 %v375, 0.1
        %v412 = vmul.f32 %v378, 0.1
        %v413 = vsel %vm381, %v319, %v397
        %v414 = vsel %vm382, %v322, %v398
        %v415 = vsel %vm383, %v327, %v399
        %v416 = vsel %vm384, %v330, %v400
        %v417 = vsel %vm385, %v335, %v401
        %v418 = vsel %vm386, %v338, %v402
        %v419 = vsel %vm387, %v343, %v403
        %v420 = vsel %vm388, %v346, %v404
        %v421 = vsel %vm389, %v351, %v405
        %v422 = vsel %vm390, %v354, %v406
        %v423 = vsel %vm391, %v359, %v407
        %v424 = vsel %vm392, %v362, %v408
        %v425 = vsel %vm393, %v367, %v409
        %v426 = vsel %vm394, %v370, %v410
        %v427 = vsel %vm395, %v375, %v411
        %v428 = vsel %vm396, %v378, %v412
        %v429 = vpack.c.bf16 %v414, %v413
        %v430 = vpack.c.bf16 %v416, %v415
        %v431 = vpack.c.bf16 %v418, %v417
        %v432 = vpack.c.bf16 %v420, %v419
        %v433 = vpack.c.bf16 %v422, %v421
        %v434 = vpack.c.bf16 %v424, %v423
        %v435 = vpack.c.bf16 %v426, %v425
        %v436 = vpack.c.bf16 %v428, %v427
        %s437 = scalar_lea.vmem %s1, 32
        %v438 = vld [vmem:[%s437] sm:$0xf]
        %v439 = vld [vmem:[%s437 + $0x4] sm:$0xf]
        %v440 = vld [vmem:[%s437 + $0x8] sm:$0xf]
        %v441 = vld [vmem:[%s437 + $0xc] sm:$0xf]
        %v442 = vld [vmem:[%s437 + $0x10] sm:$0xf]
        %v443 = vld [vmem:[%s437 + $0x14] sm:$0xf]
        %v444 = vld [vmem:[%s437 + $0x18] sm:$0xf]
        %v445 = vld [vmem:[%s437 + $0x1c] sm:$0xf]
        %v446 = vld [vmem:[%s3 + $0x1] sm:$0x1]
        %v447 = vlaneseq
        %v448 = vshrl.u32 %v447, 7
        %v449 = vsub.s32 0, %v448
        %v450 = vrot.slane %v446, %v449
        %v459 = vunpack.c.l.b16 %v438
        %v460 = vunpack.c.l.b16 %v439
        %v461 = vunpack.c.l.b16 %v440
        %v462 = vunpack.c.l.b16 %v441
        %v463 = vunpack.c.l.b16 %v442
        %v464 = vunpack.c.l.b16 %v443
        %v465 = vunpack.c.l.b16 %v444
        %v466 = vunpack.c.l.b16 %v445
        %v467 = vpack.c.b16 %v460, %v459
        %v468 = vpack.c.b16 %v462, %v461
        %v469 = vpack.c.b16 %v464, %v463
        %v470 = vpack.c.b16 %v466, %v465
        %v476 = vsel %vm259, %v429, 0
        %v479 = vsel %vm259, %v430, 0
        %v482 = vsel %vm259, %v431, 0
        %v485 = vsel %vm259, %v432, 0
        %v488 = vsel %vm259, %v433, 0
        %v491 = vsel %vm259, %v434, 0
        %v494 = vsel %vm259, %v435, 0
        %v497 = vsel %vm259, %v436, 0
        %499 = vmatprep.subr.bf16.mxu0 0
        %500 = vmatpush1.bf16.msra.mxu0 %v467
        %501 = vmatprep.subr.bf16.mxu0 0
        %502 = vmatpush1.bf16.msra.mxu0 %v468
        %503 = vmatprep.subr.bf16.mxu0 0
        %504 = vmatpush1.bf16.msra.mxu0 %v469
        %505 = vmatprep.subr.bf16.mxu0 0
        %506 = vmatpush1.bf16.msra.mxu0 %v470
        %507 = vmatprep.subr.bf16.mxu0 0
        %508 = vmatpush1.bf16.msra.mxu0 0
        %509 = vmatprep.subr.bf16.mxu0 0
        %510 = vmatpush1.bf16.msra.mxu0 0
        %511 = vmatprep.subr.bf16.mxu0 0
        %512 = vmatpush1.bf16.msra.mxu0 0
        %513 = vmatprep.subr.bf16.mxu0 0
        %514 = vmatpush1.bf16.msra.mxu0 0
        %515 = vmatprep.subr.bf16.mxu0 0
        %516 = vmatpush1.bf16.msra.mxu0 0
        %517 = vmatprep.subr.bf16.mxu0 0
        %518 = vmatpush1.bf16.msra.mxu0 0
        %519 = vmatprep.subr.bf16.mxu0 0
        %520 = vmatpush1.bf16.msra.mxu0 0
        %521 = vmatprep.subr.bf16.mxu0 0
        %522 = vmatpush1.bf16.msra.mxu0 0
        %523 = vmatprep.subr.bf16.mxu0 0
        %524 = vmatpush1.bf16.msra.mxu0 0
        %525 = vmatprep.subr.bf16.mxu0 0
        %526 = vmatpush1.bf16.msra.mxu0 0
        %527 = vmatprep.subr.bf16.mxu0 0
        %528 = vmatpush1.bf16.msra.mxu0 0
        %529 = vmatprep.subr.bf16.mxu0 0
        %530 = vmatpush1.bf16.msra.mxu0 0
        %531 = vmatprep.mubr.bf16.mxu0 0
        %532 = vmatmul.mubr.bf16.gmra.mrb[0].mxu0 %v476
        %v533 = vpop.f32.mrb[0].mxu0
        %v534 = vadd.f32 %v450, %v533
        %v535 = vpop.f32.mrb[0].mxu0
        %v536 = vpop.f32.mrb[0].mxu0
        %v537 = vadd.f32 %v450, %v536
        %v538 = vpop.f32.mrb[0].mxu0
        %539 = vmatprep.mubr.bf16.mxu0 0
        %540 = vmatmul.mubr.bf16.gmra.mrb[0].mxu0 %v479
        %v541 = vpop.f32.mrb[0].mxu0
        %v542 = vadd.f32 %v450, %v541
        %v543 = vpop.f32.mrb[0].mxu0
        %v544 = vpop.f32.mrb[0].mxu0
        %v545 = vadd.f32 %v450, %v544
        %v546 = vpop.f32.mrb[0].mxu0
        %547 = vmatprep.mubr.bf16.mxu0 0
        %548 = vmatmul.mubr.bf16.gmra.mrb[0].mxu0 %v482
        %v549 = vpop.f32.mrb[0].mxu0
        %v550 = vadd.f32 %v450, %v549
        %v551 = vpop.f32.mrb[0].mxu0
        %v552 = vpop.f32.mrb[0].mxu0
        %v553 = vadd.f32 %v450, %v552
        %v554 = vpop.f32.mrb[0].mxu0
        %555 = vmatprep.mubr.bf16.mxu0 0
        %556 = vmatmul.mubr.bf16.gmra.mrb[0].mxu0 %v485
        %v557 = vpop.f32.mrb[0].mxu0
        %v558 = vadd.f32 %v450, %v557
        %v559 = vpop.f32.mrb[0].mxu0
        %v560 = vpop.f32.mrb[0].mxu0
        %v561 = vadd.f32 %v450, %v560
        %v562 = vpop.f32.mrb[0].mxu0
        %563 = vmatprep.mubr.bf16.mxu0 0
        %564 = vmatmul.mubr.bf16.gmra.mrb[0].mxu0 %v488
        %v565 = vpop.f32.mrb[0].mxu0
        %v566 = vadd.f32 %v450, %v565
        %v567 = vpop.f32.mrb[0].mxu0
        %v568 = vpop.f32.mrb[0].mxu0
        %v569 = vadd.f32 %v450, %v568
        %v570 = vpop.f32.mrb[0].mxu0
        %571 = vmatprep.mubr.bf16.mxu0 0
        %572 = vmatmul.mubr.bf16.gmra.mrb[0].mxu0 %v491
        %v573 = vpop.f32.mrb[0].mxu0
        %v574 = vadd.f32 %v450, %v573
        %v575 = vpop.f32.mrb[0].mxu0
        %v576 = vpop.f32.mrb[0].mxu0
        %v577 = vadd.f32 %v450, %v576
        %v578 = vpop.f32.mrb[0].mxu0
        %579 = vmatprep.mubr.bf16.mxu0 0
        %580 = vmatmul.mubr.bf16.gmra.mrb[0].mxu0 %v494
        %v581 = vpop.f32.mrb[0].mxu0
        %v582 = vadd.f32 %v450, %v581
        %v583 = vpop.f32.mrb[0].mxu0
        %v584 = vpop.f32.mrb[0].mxu0
        %v585 = vadd.f32 %v450, %v584
        %v586 = vpop.f32.mrb[0].mxu0
        %587 = vmatprep.mubr.bf16.mxu0 0
        %588 = vmatmul.mubr.bf16.gmra.mrb[0].mxu0 %v497
        %v589 = vpop.f32.mrb[0].mxu0
        %v590 = vadd.f32 %v450, %v589
        %v591 = vpop.f32.mrb[0].mxu0
        %v592 = vpop.f32.mrb[0].mxu0
        %v593 = vadd.f32 %v450, %v592
        %v594 = vpop.f32.mrb[0].mxu0
        %595 = vdwg.mxu0
        %vm596 = vcmp.ge.f32.partialorder %v534, 0.0
        %vm597 = vcmp.ge.f32.partialorder %v537, 0.0
        %vm598 = vcmp.ge.f32.partialorder %v542, 0.0
        %vm599 = vcmp.ge.f32.partialorder %v545, 0.0
        %vm600 = vcmp.ge.f32.partialorder %v550, 0.0
        %vm601 = vcmp.ge.f32.partialorder %v553, 0.0
        %vm602 = vcmp.ge.f32.partialorder %v558, 0.0
        %vm603 = vcmp.ge.f32.partialorder %v561, 0.0
        %vm604 = vcmp.ge.f32.partialorder %v566, 0.0
        %vm605 = vcmp.ge.f32.partialorder %v569, 0.0
        %vm606 = vcmp.ge.f32.partialorder %v574, 0.0
        %vm607 = vcmp.ge.f32.partialorder %v577, 0.0
        %vm608 = vcmp.ge.f32.partialorder %v582, 0.0
        %vm609 = vcmp.ge.f32.partialorder %v585, 0.0
        %vm610 = vcmp.ge.f32.partialorder %v590, 0.0
        %vm611 = vcmp.ge.f32.partialorder %v593, 0.0
        %v612 = vmul.f32 %v534, 0.1
        %v613 = vmul.f32 %v537, 0.1
        %v614 = vmul.f32 %v542, 0.1
        %v615 = vmul.f32 %v545, 0.1
        %v616 = vmul.f32 %v550, 0.1
        %v617 = vmul.f32 %v553, 0.1
        %v618 = vmul.f32 %v558, 0.1
        %v619 = vmul.f32 %v561, 0.1
        %v620 = vmul.f32 %v566, 0.1
        %v621 = vmul.f32 %v569, 0.1
        %v622 = vmul.f32 %v574, 0.1
        %v623 = vmul.f32 %v577, 0.1
        %v624 = vmul.f32 %v582, 0.1
        %v625 = vmul.f32 %v585, 0.1
        %v626 = vmul.f32 %v590, 0.1
        %v627 = vmul.f32 %v593, 0.1
        %v628 = vsel %vm596, %v534, %v612
        %v629 = vsel %vm597, %v537, %v613
        %v630 = vsel %vm598, %v542, %v614
        %v631 = vsel %vm599, %v545, %v615
        %v632 = vsel %vm600, %v550, %v616
        %v633 = vsel %vm601, %v553, %v617
        %v634 = vsel %vm602, %v558, %v618
        %v635 = vsel %vm603, %v561, %v619
        %v636 = vsel %vm604, %v566, %v620
        %v637 = vsel %vm605, %v569, %v621
        %v638 = vsel %vm606, %v574, %v622
        %v639 = vsel %vm607, %v577, %v623
        %v640 = vsel %vm608, %v582, %v624
        %v641 = vsel %vm609, %v585, %v625
        %v642 = vsel %vm610, %v590, %v626
        %v643 = vsel %vm611, %v593, %v627
        %v644 = vpack.c.bf16 %v629, %v628
        %v645 = vpack.c.bf16 %v631, %v630
        %v646 = vpack.c.bf16 %v633, %v632
        %v647 = vpack.c.bf16 %v635, %v634
        %v648 = vpack.c.bf16 %v637, %v636
        %v649 = vpack.c.bf16 %v639, %v638
        %v650 = vpack.c.bf16 %v641, %v640
        %v651 = vpack.c.bf16 %v643, %v642
        %s652 = scalar_lea.vmem %s1, 64
        %v653 = vld [vmem:[%s652] sm:$0xf]
        %v654 = vld [vmem:[%s652 + $0x4] sm:$0xf]
        %v655 = vld [vmem:[%s652 + $0x8] sm:$0xf]
        %v656 = vld [vmem:[%s652 + $0xc] sm:$0xf]
        %v657 = vld [vmem:[%s652 + $0x10] sm:$0xf]
        %v658 = vld [vmem:[%s652 + $0x14] sm:$0xf]
        %v659 = vld [vmem:[%s652 + $0x18] sm:$0xf]
        %v660 = vld [vmem:[%s652 + $0x1c] sm:$0xf]
        %v661 = vld [vmem:[%s3 + $0x2] sm:$0x1]
        %v662 = vlaneseq
        %v663 = vshrl.u32 %v662, 7
        %v664 = vsub.s32 0, %v663
        %v665 = vrot.slane %v661, %v664
        %v674 = vunpack.c.l.b16 %v653
        %v675 = vunpack.c.l.b16 %v654
        %v676 = vunpack.c.l.b16 %v655
        %v677 = vunpack.c.l.b16 %v656
        %v678 = vunpack.c.l.b16 %v657
        %v679 = vunpack.c.l.b16 %v658
        %v680 = vunpack.c.l.b16 %v659
        %v681 = vunpack.c.l.b16 %v660
        %v682 = vpack.c.b16 %v675, %v674
        %v683 = vpack.c.b16 %v677, %v676
        %v684 = vpack.c.b16 %v679, %v678
        %v685 = vpack.c.b16 %v681, %v680
        %v691 = vsel %vm259, %v644, 0
        %v694 = vsel %vm259, %v645, 0
        %v697 = vsel %vm259, %v646, 0
        %v700 = vsel %vm259, %v647, 0
        %v703 = vsel %vm259, %v648, 0
        %v706 = vsel %vm259, %v649, 0
        %v709 = vsel %vm259, %v650, 0
        %v712 = vsel %vm259, %v651, 0
        %714 = vmatprep.subr.bf16.mxu0 0
        %715 = vmatpush1.bf16.msra.mxu0 %v682
        %716 = vmatprep.subr.bf16.mxu0 0
        %717 = vmatpush1.bf16.msra.mxu0 %v683
        %718 = vmatprep.subr.bf16.mxu0 0
        %719 = vmatpush1.bf16.msra.mxu0 %v684
        %720 = vmatprep.subr.bf16.mxu0 0
        %721 = vmatpush1.bf16.msra.mxu0 %v685
        %722 = vmatprep.subr.bf16.mxu0 0
        %723 = vmatpush1.bf16.msra.mxu0 0
        %724 = vmatprep.subr.bf16.mxu0 0
        %725 = vmatpush1.bf16.msra.mxu0 0
        %726 = vmatprep.subr.bf16.mxu0 0
        %727 = vmatpush1.bf16.msra.mxu0 0
        %728 = vmatprep.subr.bf16.mxu0 0
        %729 = vmatpush1.bf16.msra.mxu0 0
        %730 = vmatprep.subr.bf16.mxu0 0
        %731 = vmatpush1.bf16.msra.mxu0 0
        %732 = vmatprep.subr.bf16.mxu0 0
        %733 = vmatpush1.bf16.msra.mxu0 0
        %734 = vmatprep.subr.bf16.mxu0 0
        %735 = vmatpush1.bf16.msra.mxu0 0
        %736 = vmatprep.subr.bf16.mxu0 0
        %737 = vmatpush1.bf16.msra.mxu0 0
        %738 = vmatprep.subr.bf16.mxu0 0
        %739 = vmatpush1.bf16.msra.mxu0 0
        %740 = vmatprep.subr.bf16.mxu0 0
        %741 = vmatpush1.bf16.msra.mxu0 0
        %742 = vmatprep.subr.bf16.mxu0 0
        %743 = vmatpush1.bf16.msra.mxu0 0
        %744 = vmatprep.subr.bf16.mxu0 0
        %745 = vmatpush1.bf16.msra.mxu0 0
        %746 = vmatprep.mubr.bf16.mxu0 0
        %747 = vmatmul.mubr.bf16.gmra.mrb[0].mxu0 %v691
        %v748 = vpop.f32.mrb[0].mxu0
        %v749 = vadd.f32 %v665, %v748
        %v750 = vpop.f32.mrb[0].mxu0
        %v751 = vpop.f32.mrb[0].mxu0
        %v752 = vadd.f32 %v665, %v751
        %v753 = vpop.f32.mrb[0].mxu0
        %754 = vmatprep.mubr.bf16.mxu0 0
        %755 = vmatmul.mubr.bf16.gmra.mrb[0].mxu0 %v694
        %v756 = vpop.f32.mrb[0].mxu0
        %v757 = vadd.f32 %v665, %v756
        %v758 = vpop.f32.mrb[0].mxu0
        %v759 = vpop.f32.mrb[0].mxu0
        %v760 = vadd.f32 %v665, %v759
        %v761 = vpop.f32.mrb[0].mxu0
        %762 = vmatprep.mubr.bf16.mxu0 0
        %763 = vmatmul.mubr.bf16.gmra.mrb[0].mxu0 %v697
        %v764 = vpop.f32.mrb[0].mxu0
        %v765 = vadd.f32 %v665, %v764
        %v766 = vpop.f32.mrb[0].mxu0
        %v767 = vpop.f32.mrb[0].mxu0
        %v768 = vadd.f32 %v665, %v767
        %v769 = vpop.f32.mrb[0].mxu0
        %770 = vmatprep.mubr.bf16.mxu0 0
        %771 = vmatmul.mubr.bf16.gmra.mrb[0].mxu0 %v700
        %v772 = vpop.f32.mrb[0].mxu0
        %v773 = vadd.f32 %v665, %v772
        %v774 = vpop.f32.mrb[0].mxu0
        %v775 = vpop.f32.mrb[0].mxu0
        %v776 = vadd.f32 %v665, %v775
        %v777 = vpop.f32.mrb[0].mxu0
        %778 = vmatprep.mubr.bf16.mxu0 0
        %779 = vmatmul.mubr.bf16.gmra.mrb[0].mxu0 %v703
        %v780 = vpop.f32.mrb[0].mxu0
        %v781 = vadd.f32 %v665, %v780
        %v782 = vpop.f32.mrb[0].mxu0
        %v783 = vpop.f32.mrb[0].mxu0
        %v784 = vadd.f32 %v665, %v783
        %v785 = vpop.f32.mrb[0].mxu0
        %786 = vmatprep.mubr.bf16.mxu0 0
        %787 = vmatmul.mubr.bf16.gmra.mrb[0].mxu0 %v706
        %v788 = vpop.f32.mrb[0].mxu0
        %v789 = vadd.f32 %v665, %v788
        %v790 = vpop.f32.mrb[0].mxu0
        %v791 = vpop.f32.mrb[0].mxu0
        %v792 = vadd.f32 %v665, %v791
        %v793 = vpop.f32.mrb[0].mxu0
        %794 = vmatprep.mubr.bf16.mxu0 0
        %795 = vmatmul.mubr.bf16.gmra.mrb[0].mxu0 %v709
        %v796 = vpop.f32.mrb[0].mxu0
        %v797 = vadd.f32 %v665, %v796
        %v798 = vpop.f32.mrb[0].mxu0
        %v799 = vpop.f32.mrb[0].mxu0
        %v800 = vadd.f32 %v665, %v799
        %v801 = vpop.f32.mrb[0].mxu0
        %802 = vmatprep.mubr.bf16.mxu0 0
        %803 = vmatmul.mubr.bf16.gmra.mrb[0].mxu0 %v712
        %v804 = vpop.f32.mrb[0].mxu0
        %v805 = vadd.f32 %v665, %v804
        %v806 = vpop.f32.mrb[0].mxu0
        %v807 = vpop.f32.mrb[0].mxu0
        %v808 = vadd.f32 %v665, %v807
        %v809 = vpop.f32.mrb[0].mxu0
        %810 = vdwg.mxu0
        %vm811 = vcmp.ge.f32.partialorder %v749, 0.0
        %vm812 = vcmp.ge.f32.partialorder %v752, 0.0
        %vm813 = vcmp.ge.f32.partialorder %v757, 0.0
        %vm814 = vcmp.ge.f32.partialorder %v760, 0.0
        %vm815 = vcmp.ge.f32.partialorder %v765, 0.0
        %vm816 = vcmp.ge.f32.partialorder %v768, 0.0
        %vm817 = vcmp.ge.f32.partialorder %v773, 0.0
        %vm818 = vcmp.ge.f32.partialorder %v776, 0.0
        %vm819 = vcmp.ge.f32.partialorder %v781, 0.0
        %vm820 = vcmp.ge.f32.partialorder %v784, 0.0
        %vm821 = vcmp.ge.f32.partialorder %v789, 0.0
        %vm822 = vcmp.ge.f32.partialorder %v792, 0.0
        %vm823 = vcmp.ge.f32.partialorder %v797, 0.0
        %vm824 = vcmp.ge.f32.partialorder %v800, 0.0
        %vm825 = vcmp.ge.f32.partialorder %v805, 0.0
        %vm826 = vcmp.ge.f32.partialorder %v808, 0.0
        %v827 = vmul.f32 %v749, 0.1
        %v828 = vmul.f32 %v752, 0.1
        %v829 = vmul.f32 %v757, 0.1
        %v830 = vmul.f32 %v760, 0.1
        %v831 = vmul.f32 %v765, 0.1
        %v832 = vmul.f32 %v768, 0.1
        %v833 = vmul.f32 %v773, 0.1
        %v834 = vmul.f32 %v776, 0.1
        %v835 = vmul.f32 %v781, 0.1
        %v836 = vmul.f32 %v784, 0.1
        %v837 = vmul.f32 %v789, 0.1
        %v838 = vmul.f32 %v792, 0.1
        %v839 = vmul.f32 %v797, 0.1
        %v840 = vmul.f32 %v800, 0.1
        %v841 = vmul.f32 %v805, 0.1
        %v842 = vmul.f32 %v808, 0.1
        %v843 = vsel %vm811, %v749, %v827
        %v844 = vsel %vm812, %v752, %v828
        %v845 = vsel %vm813, %v757, %v829
        %v846 = vsel %vm814, %v760, %v830
        %v847 = vsel %vm815, %v765, %v831
        %v848 = vsel %vm816, %v768, %v832
        %v849 = vsel %vm817, %v773, %v833
        %v850 = vsel %vm818, %v776, %v834
        %v851 = vsel %vm819, %v781, %v835
        %v852 = vsel %vm820, %v784, %v836
        %v853 = vsel %vm821, %v789, %v837
        %v854 = vsel %vm822, %v792, %v838
        %v855 = vsel %vm823, %v797, %v839
        %v856 = vsel %vm824, %v800, %v840
        %v857 = vsel %vm825, %v805, %v841
        %v858 = vsel %vm826, %v808, %v842
        %v859 = vpack.c.bf16 %v844, %v843
        %v860 = vpack.c.bf16 %v846, %v845
        %v861 = vpack.c.bf16 %v848, %v847
        %v862 = vpack.c.bf16 %v850, %v849
        %v863 = vpack.c.bf16 %v852, %v851
        %v864 = vpack.c.bf16 %v854, %v853
        %v865 = vpack.c.bf16 %v856, %v855
        %v866 = vpack.c.bf16 %v858, %v857
        %v867 = vld [vmem:[%s2] sm:$0xf]
        %v869 = vsel %vm259, %v867, 0
        %v872 = vsel %vm259, %v859, 0
        %v875 = vsel %vm259, %v860, 0
        %v878 = vsel %vm259, %v861, 0
        %v881 = vsel %vm259, %v862, 0
        %v884 = vsel %vm259, %v863, 0
        %v887 = vsel %vm259, %v864, 0
        %v890 = vsel %vm259, %v865, 0
        %v893 = vsel %vm259, %v866, 0
        %895 = vmatprep.subr.bf16.mxu0 0
        %896 = vmatpush1.bf16.xpose.msra.mxu0 %v872
        %897 = vmatprep.subr.bf16.mxu0 0
        %898 = vmatpush1.bf16.xpose.msra.mxu0 %v875
        %899 = vmatprep.subr.bf16.mxu0 0
        %900 = vmatpush1.bf16.xpose.msra.mxu0 %v878
        %901 = vmatprep.subr.bf16.mxu0 0
        %902 = vmatpush1.bf16.xpose.msra.mxu0 %v881
        %903 = vmatprep.subr.bf16.mxu0 0
        %904 = vmatpush1.bf16.xpose.msra.mxu0 %v884
        %905 = vmatprep.subr.bf16.mxu0 0
        %906 = vmatpush1.bf16.xpose.msra.mxu0 %v887
        %907 = vmatprep.subr.bf16.mxu0 0
        %908 = vmatpush1.bf16.xpose.msra.mxu0 %v890
        %909 = vmatprep.subr.bf16.mxu0 0
        %910 = vmatpush1.bf16.xpose.msra.mxu0 %v893
        %911 = vmatprep.subr.bf16.mxu0 0
        %912 = vmatpush1.bf16.xpose.msra.mxu0 0
        %913 = vmatprep.subr.bf16.mxu0 0
        %914 = vmatpush1.bf16.xpose.msra.mxu0 0
        %915 = vmatprep.subr.bf16.mxu0 0
        %916 = vmatpush1.bf16.xpose.msra.mxu0 0
        %917 = vmatprep.subr.bf16.mxu0 0
        %918 = vmatpush1.bf16.xpose.msra.mxu0 0
        %919 = vmatprep.subr.bf16.mxu0 0
        %920 = vmatpush1.bf16.xpose.msra.mxu0 0
        %921 = vmatprep.subr.bf16.mxu0 0
        %922 = vmatpush1.bf16.xpose.msra.mxu0 0
        %923 = vmatprep.subr.bf16.mxu0 0
        %924 = vmatpush1.bf16.xpose.msra.mxu0 0
        %925 = vmatprep.subr.bf16.mxu0 0
        %926 = vmatpush1.bf16.xpose.msra.mxu0 0
        %927 = vmatprep.mubr.bf16.mxu0 0
        %928 = vmatmul.mubr.bf16.gmra.mrb[0].mxu0 %v869
        %v929 = vpop.f32.mrb[0].mxu0
        %v930 = vadd.f32 0.0, %v929
        %v931 = vpop.f32.mrb[0].mxu0
        %v932 = vpop.f32.mrb[0].mxu0
        %v933 = vpop.f32.mrb[0].mxu0
        %934 = vdwg.mxu0
        %v935 = vld [vmem:[%s3 + $0x3] sm:$0x1]
        %937 = vset.pattern.permute.xlu0 0
        %938 = vperm.xlu0 %937, %v935
        %v939 = vpop.permute.xlu0 %938
        %v941 = vadd.f32 %v930, %v939
        %942 = vst [vmem:[%s190] sm:$0x1] %v941
        %s943 = sand.u32 %s115, 1
        %s944 = scalar_lea.sflag [#allocation3], %s943
        %s945 = sand.u32 %s115, 1
        %s946 = scalar_lea.vmem [#allocation2], %s945
        // Predicated region
        $region37: #{tpu_custom_call.1} parent=35 // pred_check
          %p947 = pneg %p125
        $region38: #{tpu_custom_call.1} parent=35 // pred_check_branch
          %949 = sbr.rel (%p947) target = $region40
        $region39: #{tpu_custom_call.1} parent=35 // pred_region
          %s951 = ssub.s32 16, 16
          %952 = vsyncadd %s944, %s951
          %s953 = smul.addr %s18, 16
          %s954 = scalar_lea.hbm %s4, %s953
          %s956 = sshll.u32 %s946, 4
          %s957 = int_to_ptr.vmem [resolvable:$true] %s956
          %959 = dma.vmem_to_hbm [thread:$0]  %s957, 16, %s954, %s944
        $region40: #{tpu_custom_call.1} parent=35 // pred_fallthru
          _
      $region36: #{tpu_custom_call.1} parent=5 // pred_fallthru
        _
      %p960 = scmp.le.s32.totalorder 2, %s13
      // Predicated region
      $region41: #{tpu_custom_call.1} parent=5 // pred_check
        %p961 = pneg %p960
      $region42: #{tpu_custom_call.1} parent=5 // pred_check_branch
        %963 = sbr.rel (%p961) target = $region44
      $region43: #{tpu_custom_call.1} parent=5 // pred_region
        %s964 = ssub.s32 %s13, 2
        // Predicated region
        $region45: #{tpu_custom_call.1} parent=43 // pred_check
          %p965 = pneg %p131
        $region46: #{tpu_custom_call.1} parent=43 // pred_check_branch
          %967 = sbr.rel (%p965) target = $region48
        $region47: #{tpu_custom_call.1} parent=43 // pred_region
          %s968 = sand.u32 %s116, 1
          %s969 = scalar_lea.sflag [#allocation3], %s968
          %s970 = sand.u32 %s116, 1
          %s971 = scalar_lea.vmem [#allocation2], %s970
          %972 = dma.done %s969, 16
        $region48: #{tpu_custom_call.1} parent=43 // pred_fallthru
          _
      $region44: #{tpu_custom_call.1} parent=5 // pred_fallthru
        _
    $region6: #{tpu_custom_call.1} parent=1 // loop_footer
      %s17 = sadd.s32 1, %s13
    $region7: #{tpu_custom_call.1} parent=1 // loop_footer_branch
      %12 = sbr.rel target = $region3
    $region8: #{tpu_custom_call.1} parent=1 // loop_exit
      _
    %973 = vsyncpa [#allocation3], 1
    %s974 = scalar_lea.sflag [#allocation3], 1
    %975 = vsyncpa %s974, 1

</llo_original>
